<compile_context>
chip_gen: v7x
topology: tpu7x:2x2x1
jax: 0.10.0
libtpu: 0.0.40
codegen_flags: <defaults>
</compile_context>

<pallas_src>
import functools

import numpy as np
import jax
import jax.numpy as jnp
from jax.experimental import pallas as pl
from jax.experimental.pallas import tpu as pltpu

_BN_EPS = 1e-5


def _fused_deconv_block_kernel(x_ref, m_ref, gb_ref, o_ref, *, N, H, W, C, L, use_oa):
    """grid = (1,): the whole layer stack runs in one kernel invocation.

    x_ref : (N, H, W*C)        input activation, f32, lane layout w*C + c
    m_ref : (L, 3*W*C, W*C)    per-layer banded conv weights (ky folded into K), bf16
    gb_ref: (L, 2, W*C)        row 0 = gamma, row 1 = beta, lane-tiled, f32
    o_ref : (N*H, W*C)         output, lane-dense, f32
    """
    NH = N * H
    WC = W * C
    inv_cnt = 1.0 / float(N * H * W)

    zero_row = jnp.zeros((N, 1, WC), jnp.float32)   # hoisted: reused by every layer
    y = x_ref[...]                                  # (N, H, WC) f32 activation carry

    for l in range(L):                              # static L -> fully unrolled
        # ---- 3x3 transposed conv as ONE K = 3*W*C matmul on the MXU ----------
        # Zero-pad H by one row each side, pack the three H-shifted bands along
        # lanes at vreg-aligned offsets 0 / WC / 2*WC; the kx taps and the W zero
        # padding live inside the banded weight matrix.  Conv bias omitted:
        # cancelled exactly by training-mode BatchNorm mean subtraction.
        win = jnp.concatenate([zero_row, y, zero_row], axis=1)          # (N, H+2, WC)
        lhs = jnp.concatenate(
            [win[:, ky:ky + H, :].reshape(NH, WC) for ky in range(3)],
            axis=-1).astype(jnp.bfloat16)                               # (NH, 3*WC)
        acc = jnp.dot(lhs, m_ref[l], preferred_element_type=jnp.float32)  # (NH, WC) f32

        # ---- BatchNorm2d (training mode, biased variance) ---------------------
        # Row-sum + row-sum-of-squares, then a log-step XLU lane all-reduce over
        # the W lanes sharing a channel (lane index = w*C + c, period C).
        stats = jnp.concatenate([jnp.sum(acc, axis=0, keepdims=True),
                                 jnp.sum(acc * acc, axis=0, keepdims=True)],
                                axis=0)                                 # (2, WC)
        if W & (W - 1) == 0:                                            # power-of-two W
            shift_amt = C
            while shift_amt < WC:
                stats = stats + pltpu.roll(stats, shift=shift_amt, axis=1)
                shift_amt *= 2
        else:
            base = stats
            for j in range(1, W):
                stats = stats + pltpu.roll(base, shift=j * C, axis=1)
        mean = stats[0:1, :] * inv_cnt
        ex2 = stats[1:2, :] * inv_cnt
        var = ex2 - mean * mean
        gb = gb_ref[l]                                                  # (2, WC) f32
        scale = gb[0:1, :] * jax.lax.rsqrt(var + _BN_EPS)               # (1, WC)
        shift = gb[1:2, :] - mean * scale                               # (1, WC)
        yb = acc * scale + shift                                        # single f32 FMA pass

        # ---- LeakyReLU(0.01): static per-layer decision, no runtime slope select.
        if (l != L - 1) or use_oa:
            yb = jnp.where(yb > 0, yb, 0.01 * yb)

        if l != L - 1:
            y = yb.reshape(N, H, WC)        # carry stays in vregs/VMEM as values
        else:
            o_ref[...] = yb                 # lane-dense (N*H, W*C) store


def _banded_weights(w_deconv, W):
    """ConvTranspose2d weight (Cin, Cout, 3, 3) -> banded matrix (3*W*C, W*C), bf16.

    Row index = ky*W*C + w_in*C + ci, col index = w_out*C + co, with
    M[row, col] = Wconv[ky, w_in - w_out + 1, ci, co] if w_in - w_out + 1 in {0,1,2}
    and 0 <= w_in < W, else 0 (implements W zero padding), where Wconv is the
    direct-conv-equivalent (spatially flipped, (in,out)-swapped) kernel (kh,kw,Cin,Cout).
    Fusing ky into the K dimension lets the kernel issue a single K=3*W*C matmul.
    """
    C = w_deconv.shape[1]
    wc = jnp.transpose(jnp.flip(w_deconv, axis=(2, 3)), (2, 3, 0, 1))   # (3,3,Cin,Cout)
    w_idx = np.arange(W)
    kx_idx = np.arange(3)
    # ind[kx, w_in, w_out] = 1 iff w_in == w_out + kx - 1
    ind = ((w_idx[:, None] - w_idx[None, :]) == (kx_idx[:, None, None] - 1)).astype(np.float32)
    m = jnp.einsum("xiw,kxab->kiawb", jnp.asarray(ind), wc)             # (3, W, Cin, W, Cout)
    return m.reshape(3 * W * C, W * C).astype(jnp.bfloat16)


def deconv_block(x_nchw, params, use_oa=False):
    """Pallas equivalent of DeconvBlock.forward (single fused pallas_call, grid=(1,)).

    params: list of (w_deconv (C,C,3,3), bias (C,), gamma (C,), beta (C,)) per layer.
    The conv bias is accepted for parameter parity but is mathematically cancelled by
    training-mode BatchNorm, so it is never passed to the kernel.
    """
    N, C, H, W = x_nchw.shape
    L = len(params)
    assert L >= 1
    WC = W * C
    assert H % 8 == 0, "H must be a multiple of 8 (sublane-aligned in-kernel reshapes)"
    assert WC % 128 == 0, "W*C must be a multiple of 128 (lane-dense layout)"

    # NCHW -> NHWC -> (N, H, W*C): pure reshape after the transpose (W, C adjacent).
    x_in = jnp.transpose(x_nchw, (0, 2, 3, 1)).reshape(N, H, WC).astype(jnp.float32)

    m_all = jnp.stack([_banded_weights(w, W) for (w, _b, _g, _bt) in params])      # (L,3*WC,WC) bf16
    gb_all = jnp.stack([
        jnp.stack([jnp.tile(g.astype(jnp.float32), W),
                   jnp.tile(bt.astype(jnp.float32), W)])
        for (_w, _b, g, bt) in params])                                            # (L,2,WC) f32

    kernel = functools.partial(_fused_deconv_block_kernel,
                               N=N, H=H, W=W, C=C, L=L, use_oa=use_oa)

    out2d = pl.pallas_call(
        kernel,
        out_shape=jax.ShapeDtypeStruct((N * H, WC), jnp.float32),
        grid_spec=pltpu.PrefetchScalarGridSpec(
            num_scalar_prefetch=0,
            grid=(1,),
            in_specs=[
                pl.BlockSpec((N, H, WC), lambda i: (0, 0, 0)),          # input activation
                pl.BlockSpec((L, 3 * WC, WC), lambda i: (0, 0, 0)),     # all layers' banded weights
                pl.BlockSpec((L, 2, WC), lambda i: (0, 0, 0)),          # all layers' gamma/beta
            ],
            out_specs=pl.BlockSpec((N * H, WC), lambda i: (0, 0)),
        ),
        compiler_params=pltpu.CompilerParams(
            dimension_semantics=("arbitrary",),
            vmem_limit_bytes=32 * 1024 * 1024,   # tiny working set; fits v7x's 64 MiB with headroom
        ),
    )(x_in, m_all, gb_all)

    out = out2d.reshape(N, H, W, C)
    return jnp.transpose(out, (0, 3, 1, 2))              # NHWC -> NCHW


def _reference(x_nchw, params, use_oa=False):
    """Pure-JAX (f32) reference for correctness checking (includes the conv bias)."""
    x = jnp.transpose(x_nchw, (0, 2, 3, 1))
    n = len(params)
    for i, (w, b, g, bt) in enumerate(params):
        w_conv = jnp.transpose(jnp.flip(w, axis=(2, 3)), (2, 3, 0, 1))
        y = jax.lax.conv_general_dilated(
            x, w_conv, window_strides=(1, 1), padding="SAME",
            dimension_numbers=("NHWC", "HWIO", "NHWC")) + b
        mean = jnp.mean(y, axis=(0, 1, 2), keepdims=True)
        var = jnp.mean((y - mean) ** 2, axis=(0, 1, 2), keepdims=True)
        y = (y - mean) * jax.lax.rsqrt(var + _BN_EPS) * g + bt
        if (i != n - 1) or use_oa:
            y = jnp.where(y > 0, y, 0.01 * y)
        x = y
    return jnp.transpose(x, (0, 3, 1, 2))


if __name__ == "__main__":
    key = jax.random.PRNGKey(0)
    N, C, H, W = 2, 8, 16, 16
    num_layers = 2

    keys = jax.random.split(key, 1 + 4 * num_layers)
    x = jax.random.normal(keys[0], (N, C, H, W), jnp.float32)

    params = []
    for i in range(num_layers):
        kw, kb, kg, kbt = keys[1 + 4 * i: 1 + 4 * i + 4]
        w = 0.1 * jax.random.normal(kw, (C, C, 3, 3), jnp.float32)  # ConvTranspose2d weight
        b = 0.1 * jax.random.normal(kb, (C,), jnp.float32)          # conv bias (cancelled by BN)
        g = 1.0 + 0.1 * jax.random.normal(kg, (C,), jnp.float32)    # BN gamma
        bt = 0.1 * jax.random.normal(kbt, (C,), jnp.float32)        # BN beta
        params.append((w, b, g, bt))

    for use_oa in (False, True):
        out = deconv_block(x, params, use_oa=use_oa)
        out = jax.block_until_ready(out)
        ref = _reference(x, params, use_oa=use_oa)
        assert out.shape == (N, C, H, W), out.shape
        max_err = float(jnp.max(jnp.abs(out - ref)))
        assert jnp.allclose(out, ref, atol=5e-2, rtol=5e-2), max_err

    print("KERNEL_OK")
</pallas_src>

<mosaic_0001>
module attributes {stable_mosaic.version = 11 : i64} {
  func.func @_fused_deconv_block_kernel(%arg0: i32, %arg1: memref<2x16x128xf32, #tpu.memory_space<vmem>>, %arg2: memref<2x384x128xbf16, #tpu.memory_space<vmem>>, %arg3: memref<2x2x128xf32, #tpu.memory_space<vmem>>, %arg4: memref<32x128xf32, #tpu.memory_space<vmem>>) attributes {dimension_semantics = [#tpu.dimension_semantics<arbitrary>], iteration_bounds = array<i64: 1>, scalar_prefetch = 0 : i64, scratch_operands = 0 : i64, tpu.core_type = #tpu.core_type<tc>, window_params = [{pipeline_mode = #tpu.pipeline_mode<synchronous>, transform_indices = @transform_0, window_bounds = array<i64: 2, 16, 128>}, {pipeline_mode = #tpu.pipeline_mode<synchronous>, transform_indices = @transform_1, window_bounds = array<i64: 2, 384, 128>}, {pipeline_mode = #tpu.pipeline_mode<synchronous>, transform_indices = @transform_2, window_bounds = array<i64: 2, 2, 128>}, {pipeline_mode = #tpu.pipeline_mode<synchronous>, transform_indices = @transform_3, window_bounds = array<i64: 32, 128>}]} {
    %cst = arith.constant 0.000000e+00 : f32
    %0 = vector.broadcast %cst : f32 to vector<2x1x128xf32>
    %c0 = arith.constant 0 : index
    %c0_0 = arith.constant 0 : index
    %c0_1 = arith.constant 0 : index
    %1 = vector.load %arg1[%c0, %c0_0, %c0_1] : memref<2x16x128xf32, #tpu.memory_space<vmem>>, vector<2x16x128xf32>
    %2 = tpu.concatenate %0, %1, %0 in 1 : vector<2x1x128xf32>, vector<2x16x128xf32>, vector<2x1x128xf32> -> vector<2x18x128xf32>
    %3 = vector.extract_strided_slice %2 {offsets = [0, 0, 0], sizes = [2, 16, 128], strides = [1, 1, 1]} : vector<2x18x128xf32> to vector<2x16x128xf32>
    %4 = vector.shape_cast %3 : vector<2x16x128xf32> to vector<32x128xf32>
    %5 = vector.extract_strided_slice %2 {offsets = [0, 1, 0], sizes = [2, 16, 128], strides = [1, 1, 1]} : vector<2x18x128xf32> to vector<2x16x128xf32>
    %6 = vector.shape_cast %5 : vector<2x16x128xf32> to vector<32x128xf32>
    %7 = vector.extract_strided_slice %2 {offsets = [0, 2, 0], sizes = [2, 16, 128], strides = [1, 1, 1]} : vector<2x18x128xf32> to vector<2x16x128xf32>
    %8 = vector.shape_cast %7 : vector<2x16x128xf32> to vector<32x128xf32>
    %9 = tpu.concatenate %4, %6, %8 in 1 : vector<32x128xf32>, vector<32x128xf32>, vector<32x128xf32> -> vector<32x384xf32>
    %10 = arith.truncf %9 : vector<32x384xf32> to vector<32x384xbf16>
    %c0_2 = arith.constant 0 : index
    %c0_3 = arith.constant 0 : index
    %c0_4 = arith.constant 0 : index
    %11 = vector.load %arg2[%c0_2, %c0_3, %c0_4] : memref<2x384x128xbf16, #tpu.memory_space<vmem>>, vector<1x384x128xbf16>
    %12 = vector.shape_cast %11 : vector<1x384x128xbf16> to vector<384x128xbf16>
    %cst_5 = arith.constant dense<0.000000e+00> : vector<32x128xf32>
    %13 = tpu.matmul %10, %12, %cst_5 {dimension_numbers = #tpu.dot_dimension_numbers<[1], [0], [0], [1], [0, 0, 1, 1], [], []>} : vector<32x384xbf16>, vector<384x128xbf16>, vector<32x128xf32> -> vector<32x128xf32>
    %cst_6 = arith.constant dense<0.000000e+00> : vector<128xf32>
    %14 = vector.multi_reduction <add>, %13, %cst_6 [0] : vector<32x128xf32> to vector<128xf32>
    %15 = vector.shape_cast %14 : vector<128xf32> to vector<1x128xf32>
    %16 = arith.mulf %13, %13 : vector<32x128xf32>
    %cst_7 = arith.constant dense<0.000000e+00> : vector<128xf32>
    %17 = vector.multi_reduction <add>, %16, %cst_7 [0] : vector<32x128xf32> to vector<128xf32>
    %18 = vector.shape_cast %17 : vector<128xf32> to vector<1x128xf32>
    %19 = tpu.concatenate %15, %18 in 0 : vector<1x128xf32>, vector<1x128xf32> -> vector<2x128xf32>
    %c8_i32 = arith.constant 8 : i32
    %20 = tpu.dynamic_rotate %19 by %c8_i32 dim 1 : vector<2x128xf32>, i32 -> vector<2x128xf32>
    %21 = arith.addf %19, %20 : vector<2x128xf32>
    %c16_i32 = arith.constant 16 : i32
    %22 = tpu.dynamic_rotate %21 by %c16_i32 dim 1 : vector<2x128xf32>, i32 -> vector<2x128xf32>
    %23 = arith.addf %21, %22 : vector<2x128xf32>
    %c32_i32 = arith.constant 32 : i32
    %24 = tpu.dynamic_rotate %23 by %c32_i32 dim 1 : vector<2x128xf32>, i32 -> vector<2x128xf32>
    %25 = arith.addf %23, %24 : vector<2x128xf32>
    %c64_i32 = arith.constant 64 : i32
    %26 = tpu.dynamic_rotate %25 by %c64_i32 dim 1 : vector<2x128xf32>, i32 -> vector<2x128xf32>
    %27 = arith.addf %25, %26 : vector<2x128xf32>
    %28 = vector.extract_strided_slice %27 {offsets = [0, 0], sizes = [1, 128], strides = [1, 1]} : vector<2x128xf32> to vector<1x128xf32>
    %cst_8 = arith.constant 0.001953125 : f32
    %29 = vector.broadcast %cst_8 : f32 to vector<1x128xf32>
    %30 = arith.mulf %28, %29 : vector<1x128xf32>
    %31 = vector.extract_strided_slice %27 {offsets = [1, 0], sizes = [1, 128], strides = [1, 1]} : vector<2x128xf32> to vector<1x128xf32>
    %cst_9 = arith.constant 0.001953125 : f32
    %32 = vector.broadcast %cst_9 : f32 to vector<1x128xf32>
    %33 = arith.mulf %31, %32 : vector<1x128xf32>
    %34 = arith.mulf %30, %30 : vector<1x128xf32>
    %35 = arith.subf %33, %34 : vector<1x128xf32>
    %c0_10 = arith.constant 0 : index
    %c0_11 = arith.constant 0 : index
    %c0_12 = arith.constant 0 : index
    %36 = vector.load %arg3[%c0_10, %c0_11, %c0_12] : memref<2x2x128xf32, #tpu.memory_space<vmem>>, vector<1x2x128xf32>
    %37 = vector.shape_cast %36 : vector<1x2x128xf32> to vector<2x128xf32>
    %38 = vector.extract_strided_slice %37 {offsets = [0, 0], sizes = [1, 128], strides = [1, 1]} : vector<2x128xf32> to vector<1x128xf32>
    %cst_13 = arith.constant 9.99999974E-6 : f32
    %39 = vector.broadcast %cst_13 : f32 to vector<1x128xf32>
    %40 = arith.addf %35, %39 : vector<1x128xf32>
    %41 = math.rsqrt %40 : vector<1x128xf32>
    %42 = arith.mulf %38, %41 : vector<1x128xf32>
    %43 = vector.extract_strided_slice %37 {offsets = [1, 0], sizes = [1, 128], strides = [1, 1]} : vector<2x128xf32> to vector<1x128xf32>
    %44 = arith.mulf %30, %42 : vector<1x128xf32>
    %45 = arith.subf %43, %44 : vector<1x128xf32>
    %46 = vector.broadcast %42 : vector<1x128xf32> to vector<32x128xf32>
    %47 = arith.mulf %13, %46 : vector<32x128xf32>
    %48 = vector.broadcast %45 : vector<1x128xf32> to vector<32x128xf32>
    %49 = arith.addf %47, %48 : vector<32x128xf32>
    %cst_14 = arith.constant 0.000000e+00 : f32
    %50 = vector.broadcast %cst_14 : f32 to vector<32x128xf32>
    %51 = arith.cmpf ogt, %49, %50 : vector<32x128xf32>
    %cst_15 = arith.constant 0.00999999977 : f32
    %52 = vector.broadcast %cst_15 : f32 to vector<32x128xf32>
    %53 = arith.mulf %52, %49 : vector<32x128xf32>
    %54 = arith.select %51, %49, %53 : vector<32x128xi1>, vector<32x128xf32>
    %55 = vector.shape_cast %54 : vector<32x128xf32> to vector<2x16x128xf32>
    %56 = tpu.concatenate %0, %55, %0 in 1 : vector<2x1x128xf32>, vector<2x16x128xf32>, vector<2x1x128xf32> -> vector<2x18x128xf32>
    %57 = vector.extract_strided_slice %56 {offsets = [0, 0, 0], sizes = [2, 16, 128], strides = [1, 1, 1]} : vector<2x18x128xf32> to vector<2x16x128xf32>
    %58 = vector.shape_cast %57 : vector<2x16x128xf32> to vector<32x128xf32>
    %59 = vector.extract_strided_slice %56 {offsets = [0, 1, 0], sizes = [2, 16, 128], strides = [1, 1, 1]} : vector<2x18x128xf32> to vector<2x16x128xf32>
    %60 = vector.shape_cast %59 : vector<2x16x128xf32> to vector<32x128xf32>
    %61 = vector.extract_strided_slice %56 {offsets = [0, 2, 0], sizes = [2, 16, 128], strides = [1, 1, 1]} : vector<2x18x128xf32> to vector<2x16x128xf32>
    %62 = vector.shape_cast %61 : vector<2x16x128xf32> to vector<32x128xf32>
    %63 = tpu.concatenate %58, %60, %62 in 1 : vector<32x128xf32>, vector<32x128xf32>, vector<32x128xf32> -> vector<32x384xf32>
    %64 = arith.truncf %63 : vector<32x384xf32> to vector<32x384xbf16>
    %c1 = arith.constant 1 : index
    %c0_16 = arith.constant 0 : index
    %c0_17 = arith.constant 0 : index
    %65 = vector.load %arg2[%c1, %c0_16, %c0_17] : memref<2x384x128xbf16, #tpu.memory_space<vmem>>, vector<1x384x128xbf16>
    %66 = vector.shape_cast %65 : vector<1x384x128xbf16> to vector<384x128xbf16>
    %cst_18 = arith.constant dense<0.000000e+00> : vector<32x128xf32>
    %67 = tpu.matmul %64, %66, %cst_18 {dimension_numbers = #tpu.dot_dimension_numbers<[1], [0], [0], [1], [0, 0, 1, 1], [], []>} : vector<32x384xbf16>, vector<384x128xbf16>, vector<32x128xf32> -> vector<32x128xf32>
    %cst_19 = arith.constant dense<0.000000e+00> : vector<128xf32>
    %68 = vector.multi_reduction <add>, %67, %cst_19 [0] : vector<32x128xf32> to vector<128xf32>
    %69 = vector.shape_cast %68 : vector<128xf32> to vector<1x128xf32>
    %70 = arith.mulf %67, %67 : vector<32x128xf32>
    %cst_20 = arith.constant dense<0.000000e+00> : vector<128xf32>
    %71 = vector.multi_reduction <add>, %70, %cst_20 [0] : vector<32x128xf32> to vector<128xf32>
    %72 = vector.shape_cast %71 : vector<128xf32> to vector<1x128xf32>
    %73 = tpu.concatenate %69, %72 in 0 : vector<1x128xf32>, vector<1x128xf32> -> vector<2x128xf32>
    %c8_i32_21 = arith.constant 8 : i32
    %74 = tpu.dynamic_rotate %73 by %c8_i32_21 dim 1 : vector<2x128xf32>, i32 -> vector<2x128xf32>
    %75 = arith.addf %73, %74 : vector<2x128xf32>
    %c16_i32_22 = arith.constant 16 : i32
    %76 = tpu.dynamic_rotate %75 by %c16_i32_22 dim 1 : vector<2x128xf32>, i32 -> vector<2x128xf32>
    %77 = arith.addf %75, %76 : vector<2x128xf32>
    %c32_i32_23 = arith.constant 32 : i32
    %78 = tpu.dynamic_rotate %77 by %c32_i32_23 dim 1 : vector<2x128xf32>, i32 -> vector<2x128xf32>
    %79 = arith.addf %77, %78 : vector<2x128xf32>
    %c64_i32_24 = arith.constant 64 : i32
    %80 = tpu.dynamic_rotate %79 by %c64_i32_24 dim 1 : vector<2x128xf32>, i32 -> vector<2x128xf32>
    %81 = arith.addf %79, %80 : vector<2x128xf32>
    %82 = vector.extract_strided_slice %81 {offsets = [0, 0], sizes = [1, 128], strides = [1, 1]} : vector<2x128xf32> to vector<1x128xf32>
    %cst_25 = arith.constant 0.001953125 : f32
    %83 = vector.broadcast %cst_25 : f32 to vector<1x128xf32>
    %84 = arith.mulf %82, %83 : vector<1x128xf32>
    %85 = vector.extract_strided_slice %81 {offsets = [1, 0], sizes = [1, 128], strides = [1, 1]} : vector<2x128xf32> to vector<1x128xf32>
    %cst_26 = arith.constant 0.001953125 : f32
    %86 = vector.broadcast %cst_26 : f32 to vector<1x128xf32>
    %87 = arith.mulf %85, %86 : vector<1x128xf32>
    %88 = arith.mulf %84, %84 : vector<1x128xf32>
    %89 = arith.subf %87, %88 : vector<1x128xf32>
    %c1_27 = arith.constant 1 : index
    %c0_28 = arith.constant 0 : index
    %c0_29 = arith.constant 0 : index
    %90 = vector.load %arg3[%c1_27, %c0_28, %c0_29] : memref<2x2x128xf32, #tpu.memory_space<vmem>>, vector<1x2x128xf32>
    %91 = vector.shape_cast %90 : vector<1x2x128xf32> to vector<2x128xf32>
    %92 = vector.extract_strided_slice %91 {offsets = [0, 0], sizes = [1, 128], strides = [1, 1]} : vector<2x128xf32> to vector<1x128xf32>
    %cst_30 = arith.constant 9.99999974E-6 : f32
    %93 = vector.broadcast %cst_30 : f32 to vector<1x128xf32>
    %94 = arith.addf %89, %93 : vector<1x128xf32>
    %95 = math.rsqrt %94 : vector<1x128xf32>
    %96 = arith.mulf %92, %95 : vector<1x128xf32>
    %97 = vector.extract_strided_slice %91 {offsets = [1, 0], sizes = [1, 128], strides = [1, 1]} : vector<2x128xf32> to vector<1x128xf32>
    %98 = arith.mulf %84, %96 : vector<1x128xf32>
    %99 = arith.subf %97, %98 : vector<1x128xf32>
    %100 = vector.broadcast %96 : vector<1x128xf32> to vector<32x128xf32>
    %101 = arith.mulf %67, %100 : vector<32x128xf32>
    %102 = vector.broadcast %99 : vector<1x128xf32> to vector<32x128xf32>
    %103 = arith.addf %101, %102 : vector<32x128xf32>
    %c0_31 = arith.constant 0 : index
    %c0_32 = arith.constant 0 : index
    %104 = vector.load %arg4[%c0_31, %c0_32] : memref<32x128xf32, #tpu.memory_space<vmem>>, vector<32x128xf32>
    tpu.vector_store %arg4[%c0_31, %c0_32], %103 {strides = array<i32>} : memref<32x128xf32, #tpu.memory_space<vmem>>, vector<32x128xf32>,
    return
  }
  func.func @transform_0(%arg0: i32) -> (i32, i32, i32) {
    %c0_i32 = arith.constant 0 : i32
    %c0_i32_0 = arith.constant 0 : i32
    %c0_i32_1 = arith.constant 0 : i32
    %c0_i32_2 = arith.constant 0 : i32
    return %c0_i32, %c0_i32_0, %c0_i32_1 : i32, i32, i32
  }
  func.func @transform_1(%arg0: i32) -> (i32, i32, i32) {
    %c0_i32 = arith.constant 0 : i32
    %c0_i32_0 = arith.constant 0 : i32
    %c0_i32_1 = arith.constant 0 : i32
    %c0_i32_2 = arith.constant 0 : i32
    return %c0_i32, %c0_i32_0, %c0_i32_1 : i32, i32, i32
  }
  func.func @transform_2(%arg0: i32) -> (i32, i32, i32) {
    %c0_i32 = arith.constant 0 : i32
    %c0_i32_0 = arith.constant 0 : i32
    %c0_i32_1 = arith.constant 0 : i32
    %c0_i32_2 = arith.constant 0 : i32
    return %c0_i32, %c0_i32_0, %c0_i32_1 : i32, i32, i32
  }
  func.func @transform_3(%arg0: i32) -> (i32, i32) {
    %c0_i32 = arith.constant 0 : i32
    %c0_i32_0 = arith.constant 0 : i32
    %c0_i32_1 = arith.constant 0 : i32
    return %c0_i32, %c0_i32_0 : i32, i32
  }
}

</mosaic_0001>

<llo_original>
// kernel: tpu_custom_call.1
$region0: #{tpu_custom_call.1}
  #allocation0 [shape = 'u32[]', space=smem, size = 0x4, offset = 0x4, fixed_abs, tag = 'smem constant byte address 0x4 - core index']
  #allocation1 [shape = 'u32[144,128]{1,0:T(1,128)}', space=vmem, size = 0x12000, scoped, tag = 'internal scratch']
  %s0 = inlined_call_operand.hbm [shape: f32[2,16,128], index: 0, kind: input, shape index: {}]
  %s1 = inlined_call_operand.hbm [shape: bf16[2,384,128], index: 1, kind: input, shape index: {}]
  %s2 = inlined_call_operand.vmem [shape: f32[2,2,128], index: 2, kind: input, shape index: {}]
  %s3 = inlined_call_operand.hbm [shape: f32[32,128], index: 3, kind: output, shape index: {}]
  %s4 = sld [smem:[#allocation0]]
  $region30: #{tpu_custom_call.1} parent=0
    _
  %s6 = ssub.s32 1, %s4
  %s7 = scalar_select 0, %s6, %s4
  $region1: #{tpu_custom_call.1} parent=0
    #allocation2 [shape = 'u8[16384]{0}', space=vmem, size = 0x4000, scoped, tag = 'input window, operand 0, single buffered']
    #allocation3 [shape = 's32[1]{0}', space=sflag, size = 0x4, scoped, tag = 'scoped memory for tpu_custom_call.1']
    #allocation4 [shape = 's32[1]{0}', space=sflag, size = 0x4, scoped, tag = 'scoped memory for tpu_custom_call.1']
    #allocation5 [shape = 'u8[196608]{0}', space=vmem, size = 0x30000, scoped, tag = 'input window, operand 1, single buffered']
    #allocation6 [shape = 's32[1]{0}', space=sflag, size = 0x4, scoped, tag = 'scoped memory for tpu_custom_call.1']
    #allocation7 [shape = 'u8[16384]{0}', space=vmem, size = 0x4000, scoped, tag = 'output window, operand 0, single buffered']
    %8 = vsyncpa [#allocation3], 0
    %9 = vsyncpa [#allocation6], 0
    %10 = vsyncpa [#allocation4], 0
    // Predicated region
    $region2: #{tpu_custom_call.1} parent=1 // pred_check
      _
    $region3: #{tpu_custom_call.1} parent=1 // pred_check_branch
      %12 = sbr.rel (0) target = $region5
    $region4: #{tpu_custom_call.1} parent=1 // pred_region
      %s14 = ssub.s32 512, 512
      %15 = vsyncadd [#allocation3], %s14
      %s16 = sshll.u32 [#allocation2], 4
      %s17 = int_to_ptr.vmem [resolvable:$true] %s16
      %22 = dma.hbm_to_vmem [thread:$0]  %s0, 512, %s17, [#allocation3], 128, 128, 8
    $region5: #{tpu_custom_call.1} parent=1 // pred_fallthru
      _
    // Predicated region
    $region6: #{tpu_custom_call.1} parent=1 // pred_check
      _
    $region7: #{tpu_custom_call.1} parent=1 // pred_check_branch
      %24 = sbr.rel (0) target = $region9
    $region8: #{tpu_custom_call.1} parent=1 // pred_region
      %s26 = ssub.s32 6144, 6144
      %27 = vsyncadd [#allocation6], %s26
      %s28 = sshll.u32 [#allocation5], 4
      %s29 = int_to_ptr.vmem [resolvable:$true] %s28
      %34 = dma.hbm_to_vmem [thread:$0]  %s1, 6144, %s29, [#allocation6], 64, 64, 4
    $region9: #{tpu_custom_call.1} parent=1 // pred_fallthru
      _
    // Predicated region
    $region10: #{tpu_custom_call.1} parent=1 // pred_check
      _
    $region11: #{tpu_custom_call.1} parent=1 // pred_check_branch
      %36 = sbr.rel (0) target = $region13
    $region12: #{tpu_custom_call.1} parent=1 // pred_region
      _
    $region13: #{tpu_custom_call.1} parent=1 // pred_fallthru
      _
    // Predicated region
    $region14: #{tpu_custom_call.1} parent=1 // pred_check
      _
    $region15: #{tpu_custom_call.1} parent=1 // pred_check_branch
      %38 = sbr.rel (0) target = $region17
    $region16: #{tpu_custom_call.1} parent=1 // pred_region
      %39 = dma.done [#allocation3], 512
    $region17: #{tpu_custom_call.1} parent=1 // pred_fallthru
      _
    // Predicated region
    $region18: #{tpu_custom_call.1} parent=1 // pred_check
      _
    $region19: #{tpu_custom_call.1} parent=1 // pred_check_branch
      %41 = sbr.rel (0) target = $region21
    $region20: #{tpu_custom_call.1} parent=1 // pred_region
      %42 = dma.done [#allocation6], 6144
    $region21: #{tpu_custom_call.1} parent=1 // pred_fallthru
      _
    %v44 = vld [vmem:[#allocation2] sm:$0xff]
    %v45 = vld [vmem:[#allocation2 + $0x8] sm:$0xff]
    %v46 = vld [vmem:[#allocation2 + $0x10] sm:$0xff]
    %v47 = vld [vmem:[#allocation2 + $0x18] sm:$0xff]
    %vm52 = vcmask 1040384
    %v53 = vrot.slane %v44, 7
    %v54 = vrot.slane %v45, 7
    %v55 = vsel %vm52, %v53, %v54
    %v56 = vrot.slane %v46, 7
    %v57 = vrot.slane %v47, 7
    %v58 = vsel %vm52, %v56, %v57
    %v65 = vsel %vm52, 0.0, %v53
    %v66 = vsel %vm52, 0.0, %v56
    %v67 = vsel %vm52, %v54, 0.0
    %v68 = vsel %vm52, %v57, 0.0
    %vm73 = vcmask 1046528
    %v74 = vrot.slane %v65, 1
    %v75 = vrot.slane %v55, 1
    %v76 = vsel %vm73, %v74, %v75
    %v77 = vrot.slane %v67, 1
    %v78 = vsel %vm73, %v75, %v77
    %v79 = vrot.slane %v66, 1
    %v80 = vrot.slane %v58, 1
    %v81 = vsel %vm73, %v79, %v80
    %v82 = vrot.slane %v68, 1
    %v83 = vsel %vm73, %v80, %v82
    %vm88 = vcmask 1045504
    %v89 = vrot.slane %v65, 2
    %v90 = vrot.slane %v55, 2
    %v91 = vsel %vm88, %v89, %v90
    %v92 = vrot.slane %v67, 2
    %v93 = vsel %vm88, %v90, %v92
    %v94 = vrot.slane %v66, 2
    %v95 = vrot.slane %v58, 2
    %v96 = vsel %vm88, %v94, %v95
    %v97 = vrot.slane %v68, 2
    %v98 = vsel %vm88, %v95, %v97
    %v103 = vpack.c.bf16 %v55, %v65
    %v104 = vpack.c.bf16 %v78, %v76
    %v105 = vpack.c.bf16 %v93, %v91
    %v106 = vpack.c.bf16 %v58, %v66
    %v107 = vpack.c.bf16 %v83, %v81
    %v108 = vpack.c.bf16 %v98, %v96
    %v109 = vld [vmem:[#allocation5] sm:$0xf]
    %v110 = vld [vmem:[#allocation5 + $0x4] sm:$0xf]
    %v111 = vld [vmem:[#allocation5 + $0x8] sm:$0xf]
    %v112 = vld [vmem:[#allocation5 + $0xc] sm:$0xf]
    %v113 = vld [vmem:[#allocation5 + $0x10] sm:$0xf]
    %v114 = vld [vmem:[#allocation5 + $0x14] sm:$0xf]
    %v115 = vld [vmem:[#allocation5 + $0x18] sm:$0xf]
    %v116 = vld [vmem:[#allocation5 + $0x1c] sm:$0xf]
    %v117 = vld [vmem:[#allocation5 + $0x20] sm:$0xf]
    %v118 = vld [vmem:[#allocation5 + $0x24] sm:$0xf]
    %v119 = vld [vmem:[#allocation5 + $0x28] sm:$0xf]
    %v120 = vld [vmem:[#allocation5 + $0x2c] sm:$0xf]
    %v121 = vld [vmem:[#allocation5 + $0x30] sm:$0xf]
    %v122 = vld [vmem:[#allocation5 + $0x34] sm:$0xf]
    %v123 = vld [vmem:[#allocation5 + $0x38] sm:$0xf]
    %v124 = vld [vmem:[#allocation5 + $0x3c] sm:$0xf]
    %v125 = vld [vmem:[#allocation5 + $0x40] sm:$0xf]
    %v126 = vld [vmem:[#allocation5 + $0x44] sm:$0xf]
    %v127 = vld [vmem:[#allocation5 + $0x48] sm:$0xf]
    %v128 = vld [vmem:[#allocation5 + $0x4c] sm:$0xf]
    %v129 = vld [vmem:[#allocation5 + $0x50] sm:$0xf]
    %v130 = vld [vmem:[#allocation5 + $0x54] sm:$0xf]
    %v131 = vld [vmem:[#allocation5 + $0x58] sm:$0xf]
    %v132 = vld [vmem:[#allocation5 + $0x5c] sm:$0xf]
    %v133 = vld [vmem:[#allocation5 + $0x60] sm:$0xf]
    %v134 = vld [vmem:[#allocation5 + $0x64] sm:$0xf]
    %v135 = vld [vmem:[#allocation5 + $0x68] sm:$0xf]
    %v136 = vld [vmem:[#allocation5 + $0x6c] sm:$0xf]
    %v137 = vld [vmem:[#allocation5 + $0x70] sm:$0xf]
    %v138 = vld [vmem:[#allocation5 + $0x74] sm:$0xf]
    %v139 = vld [vmem:[#allocation5 + $0x78] sm:$0xf]
    %v140 = vld [vmem:[#allocation5 + $0x7c] sm:$0xf]
    %v141 = vld [vmem:[#allocation5 + $0x80] sm:$0xf]
    %v142 = vld [vmem:[#allocation5 + $0x84] sm:$0xf]
    %v143 = vld [vmem:[#allocation5 + $0x88] sm:$0xf]
    %v144 = vld [vmem:[#allocation5 + $0x8c] sm:$0xf]
    %v145 = vld [vmem:[#allocation5 + $0x90] sm:$0xf]
    %v146 = vld [vmem:[#allocation5 + $0x94] sm:$0xf]
    %v147 = vld [vmem:[#allocation5 + $0x98] sm:$0xf]
    %v148 = vld [vmem:[#allocation5 + $0x9c] sm:$0xf]
    %v149 = vld [vmem:[#allocation5 + $0xa0] sm:$0xf]
    %v150 = vld [vmem:[#allocation5 + $0xa4] sm:$0xf]
    %v151 = vld [vmem:[#allocation5 + $0xa8] sm:$0xf]
    %v152 = vld [vmem:[#allocation5 + $0xac] sm:$0xf]
    %v153 = vld [vmem:[#allocation5 + $0xb0] sm:$0xf]
    %v154 = vld [vmem:[#allocation5 + $0xb4] sm:$0xf]
    %v155 = vld [vmem:[#allocation5 + $0xb8] sm:$0xf]
    %v156 = vld [vmem:[#allocation5 + $0xbc] sm:$0xf]
    %v205 = vunpack.c.l.b16 %v109
    %v206 = vunpack.c.l.b16 %v110
    %v207 = vunpack.c.l.b16 %v111
    %v208 = vunpack.c.l.b16 %v112
    %v209 = vunpack.c.l.b16 %v113
    %v210 = vunpack.c.l.b16 %v114
    %v211 = vunpack.c.l.b16 %v115
    %v212 = vunpack.c.l.b16 %v116
    %v213 = vunpack.c.l.b16 %v117
    %v214 = vunpack.c.l.b16 %v118
    %v215 = vunpack.c.l.b16 %v119
    %v216 = vunpack.c.l.b16 %v120
    %v217 = vunpack.c.l.b16 %v121
    %v218 = vunpack.c.l.b16 %v122
    %v219 = vunpack.c.l.b16 %v123
    %v220 = vunpack.c.l.b16 %v124
    %v221 = vunpack.c.l.b16 %v125
    %v222 = vunpack.c.l.b16 %v126
    %v223 = vunpack.c.l.b16 %v127
    %v224 = vunpack.c.l.b16 %v128
    %v225 = vunpack.c.l.b16 %v129
    %v226 = vunpack.c.l.b16 %v130
    %v227 = vunpack.c.l.b16 %v131
    %v228 = vunpack.c.l.b16 %v132
    %v229 = vunpack.c.l.b16 %v133
    %v230 = vunpack.c.l.b16 %v134
    %v231 = vunpack.c.l.b16 %v135
    %v232 = vunpack.c.l.b16 %v136
    %v233 = vunpack.c.l.b16 %v137
    %v234 = vunpack.c.l.b16 %v138
    %v235 = vunpack.c.l.b16 %v139
    %v236 = vunpack.c.l.b16 %v140
    %v237 = vunpack.c.l.b16 %v141
    %v238 = vunpack.c.l.b16 %v142
    %v239 = vunpack.c.l.b16 %v143
    %v240 = vunpack.c.l.b16 %v144
    %v241 = vunpack.c.l.b16 %v145
    %v242 = vunpack.c.l.b16 %v146
    %v243 = vunpack.c.l.b16 %v147
    %v244 = vunpack.c.l.b16 %v148
    %v245 = vunpack.c.l.b16 %v149
    %v246 = vunpack.c.l.b16 %v150
    %v247 = vunpack.c.l.b16 %v151
    %v248 = vunpack.c.l.b16 %v152
    %v249 = vunpack.c.l.b16 %v153
    %v250 = vunpack.c.l.b16 %v154
    %v251 = vunpack.c.l.b16 %v155
    %v252 = vunpack.c.l.b16 %v156
    %v253 = vpack.c.b16 %v206, %v205
    %v254 = vpack.c.b16 %v208, %v207
    %v255 = vpack.c.b16 %v210, %v209
    %v256 = vpack.c.b16 %v212, %v211
    %v257 = vpack.c.b16 %v214, %v213
    %v258 = vpack.c.b16 %v216, %v215
    %v259 = vpack.c.b16 %v218, %v217
    %v260 = vpack.c.b16 %v220, %v219
    %v261 = vpack.c.b16 %v222, %v221
    %v262 = vpack.c.b16 %v224, %v223
    %v263 = vpack.c.b16 %v226, %v225
    %v264 = vpack.c.b16 %v228, %v227
    %v265 = vpack.c.b16 %v230, %v229
    %v266 = vpack.c.b16 %v232, %v231
    %v267 = vpack.c.b16 %v234, %v233
    %v268 = vpack.c.b16 %v236, %v235
    %v269 = vpack.c.b16 %v238, %v237
    %v270 = vpack.c.b16 %v240, %v239
    %v271 = vpack.c.b16 %v242, %v241
    %v272 = vpack.c.b16 %v244, %v243
    %v273 = vpack.c.b16 %v246, %v245
    %v274 = vpack.c.b16 %v248, %v247
    %v275 = vpack.c.b16 %v250, %v249
    %v276 = vpack.c.b16 %v252, %v251
    %301 = vmatprep.subr.bf16.mxu0 0
    %302 = vmatpush1.bf16.msra.mxu0 %v253
    %303 = vmatprep.subr.bf16.mxu0 0
    %304 = vmatpush1.bf16.msra.mxu0 %v254
    %305 = vmatprep.subr.bf16.mxu0 0
    %306 = vmatpush1.bf16.msra.mxu0 %v255
    %307 = vmatprep.subr.bf16.mxu0 0
    %308 = vmatpush1.bf16.msra.mxu0 %v256
    %309 = vmatprep.subr.bf16.mxu0 0
    %310 = vmatpush1.bf16.msra.mxu0 %v257
    %311 = vmatprep.subr.bf16.mxu0 0
    %312 = vmatpush1.bf16.msra.mxu0 %v258
    %313 = vmatprep.subr.bf16.mxu0 0
    %314 = vmatpush1.bf16.msra.mxu0 %v259
    %315 = vmatprep.subr.bf16.mxu0 0
    %316 = vmatpush1.bf16.msra.mxu0 %v260
    %317 = vmatprep.subr.bf16.mxu0 0
    %318 = vmatpush1.bf16.msra.mxu0 %v261
    %319 = vmatprep.subr.bf16.mxu0 0
    %320 = vmatpush1.bf16.msra.mxu0 %v262
    %321 = vmatprep.subr.bf16.mxu0 0
    %322 = vmatpush1.bf16.msra.mxu0 %v263
    %323 = vmatprep.subr.bf16.mxu0 0
    %324 = vmatpush1.bf16.msra.mxu0 %v264
    %325 = vmatprep.subr.bf16.mxu0 0
    %326 = vmatpush1.bf16.msra.mxu0 %v265
    %327 = vmatprep.subr.bf16.mxu0 0
    %328 = vmatpush1.bf16.msra.mxu0 %v266
    %329 = vmatprep.subr.bf16.mxu0 0
    %330 = vmatpush1.bf16.msra.mxu0 %v267
    %331 = vmatprep.subr.bf16.mxu0 0
    %332 = vmatpush1.bf16.msra.mxu0 %v268
    %333 = vmatprep.mubr.bf16.mxu0 %v104
    %334 = vmatmul.mubr.bf16.gmra.mrb[0].mxu0 %v103
    %v335 = vpop.f32.mrb[0].mxu0
    %v336 = vadd.f32 0.0, %v335
    %v337 = vpop.f32.mrb[0].mxu0
    %v338 = vpop.f32.mrb[0].mxu0
    %v339 = vadd.f32 0.0, %v338
    %v340 = vpop.f32.mrb[0].mxu0
    %341 = vmatprep.mubr.bf16.mxu0 %v107
    %342 = vmatmul.mubr.bf16.gmra.mrb[0].mxu0 %v106
    %v343 = vpop.f32.mrb[0].mxu0
    %v344 = vadd.f32 0.0, %v343
    %v345 = vpop.f32.mrb[0].mxu0
    %v346 = vpop.f32.mrb[0].mxu0
    %v347 = vadd.f32 0.0, %v346
    %v348 = vpop.f32.mrb[0].mxu0
    %349 = vdwg.mxu0
    %350 = vmatprep.subr.bf16.mxu0 0
    %351 = vmatpush1.bf16.msra.mxu0 %v269
    %352 = vmatprep.subr.bf16.mxu0 0
    %353 = vmatpush1.bf16.msra.mxu0 %v270
    %354 = vmatprep.subr.bf16.mxu0 0
    %355 = vmatpush1.bf16.msra.mxu0 %v271
    %356 = vmatprep.subr.bf16.mxu0 0
    %357 = vmatpush1.bf16.msra.mxu0 %v272
    %358 = vmatprep.subr.bf16.mxu0 0
    %359 = vmatpush1.bf16.msra.mxu0 %v273
    %360 = vmatprep.subr.bf16.mxu0 0
    %361 = vmatpush1.bf16.msra.mxu0 %v274
    %362 = vmatprep.subr.bf16.mxu0 0
    %363 = vmatpush1.bf16.msra.mxu0 %v275
    %364 = vmatprep.subr.bf16.mxu0 0
    %365 = vmatpush1.bf16.msra.mxu0 %v276
    %366 = vmatprep.subr.bf16.mxu0 0
    %367 = vmatpush1.bf16.msra.mxu0 0
    %368 = vmatprep.subr.bf16.mxu0 0
    %369 = vmatpush1.bf16.msra.mxu0 0
    %370 = vmatprep.subr.bf16.mxu0 0
    %371 = vmatpush1.bf16.msra.mxu0 0
    %372 = vmatprep.subr.bf16.mxu0 0
    %373 = vmatpush1.bf16.msra.mxu0 0
    %374 = vmatprep.subr.bf16.mxu0 0
    %375 = vmatpush1.bf16.msra.mxu0 0
    %376 = vmatprep.subr.bf16.mxu0 0
    %377 = vmatpush1.bf16.msra.mxu0 0
    %378 = vmatprep.subr.bf16.mxu0 0
    %379 = vmatpush1.bf16.msra.mxu0 0
    %380 = vmatprep.subr.bf16.mxu0 0
    %381 = vmatpush1.bf16.msra.mxu0 0
    %382 = vmatprep.mubr.bf16.mxu0 0
    %383 = vmatmul.mubr.bf16.gmra.mrb[0].mxu0 %v105
    %v384 = vpop.f32.mrb[0].mxu0
    %v385 = vadd.f32 %v336, %v384
    %v386 = vpop.f32.mrb[0].mxu0
    %v387 = vpop.f32.mrb[0].mxu0
    %v388 = vadd.f32 %v339, %v387
    %v389 = vpop.f32.mrb[0].mxu0
    %390 = vmatprep.mubr.bf16.mxu0 0
    %391 = vmatmul.mubr.bf16.gmra.mrb[0].mxu0 %v108
    %v392 = vpop.f32.mrb[0].mxu0
    %v393 = vadd.f32 %v344, %v392
    %v394 = vpop.f32.mrb[0].mxu0
    %v395 = vpop.f32.mrb[0].mxu0
    %v396 = vadd.f32 %v347, %v395
    %v397 = vpop.f32.mrb[0].mxu0
    %398 = vdwg.mxu0
    %v399 = vadd.f32 %v385, %v388
    %v400 = vadd.f32 %v399, %v393
    %v401 = vadd.f32 %v400, %v396
    %v402 = vrot.slane %v401, 4
    %v403 = vadd.f32 %v401, %v402
    %v404 = vrot.slane %v403, 2
    %v405 = vadd.f32 %v403, %v404
    %v406 = vrot.slane %v405, 1
    %v407 = vadd.f32 %v405, %v406
    %v408 = vmul.f32 %v385, %v385
    %v409 = vmul.f32 %v388, %v388
    %v410 = vmul.f32 %v393, %v393
    %v411 = vmul.f32 %v396, %v396
    %v412 = vadd.f32 %v408, %v409
    %v413 = vadd.f32 %v412, %v410
    %v414 = vadd.f32 %v413, %v411
    %v415 = vrot.slane %v414, 4
    %v416 = vadd.f32 %v414, %v415
    %v417 = vrot.slane %v416, 2
    %v418 = vadd.f32 %v416, %v417
    %v419 = vrot.slane %v418, 1
    %v420 = vadd.f32 %v418, %v419
    %v421 = vsel %vm52, %v407, %v420
    %422 = vrot.lane.b32.xlu0 %v421, 8
    %v423 = vpop.permute.xlu0 %422
    %v424 = vadd.f32 %v421, %v423
    %425 = vrot.lane.b32.xlu0 %v424, 16
    %v426 = vpop.permute.xlu0 %425
    %v427 = vadd.f32 %v424, %v426
    %428 = vrot.lane.b32.xlu0 %v427, 32
    %v429 = vpop.permute.xlu0 %428
    %v430 = vadd.f32 %v427, %v429
    %431 = vrot.lane.b32.xlu0 %v430, 64
    %v432 = vpop.permute.xlu0 %431
    %v433 = vadd.f32 %v430, %v432
    %v434 = vmul.f32 %v433, 0.001953125
    %v435 = vmul.f32 %v434, %v434
    %v437 = vrot.slane %v435, 7
    %v439 = vsub.f32 %v434, %v437
    %v440 = vld [vmem:[%s2] sm:$0x3]
    %v441 = vadd.f32 %v439, 1e-05
    %v442 = vrsqrt.pop %v441
    %v444 = vrot.slane %v442, 1
    %v446 = vmul.f32 %v440, %v444
    %v447 = vmul.f32 %v434, %v446
    %v449 = vrot.slane %v447, 7
    %v451 = vsub.f32 %v440, %v449
    %v452 = vlaneseq
    %v453 = vshrl.u32 %v452, 7
    %v454 = vsub.s32 0, %v453
    %v455 = vrot.slane %v446, %v454
    %v456 = vmul.f32 %v385, %v455
    %v457 = vmul.f32 %v388, %v455
    %v458 = vmul.f32 %v393, %v455
    %v459 = vmul.f32 %v396, %v455
    %v460 = vlaneseq
    %v461 = vshrl.u32 %v460, 7
    %v462 = vsub.s32 1, %v461
    %v463 = vrot.slane %v451, %v462
    %v464 = vadd.f32 %v456, %v463
    %v465 = vadd.f32 %v457, %v463
    %v466 = vadd.f32 %v458, %v463
    %v467 = vadd.f32 %v459, %v463
    %vm468 = vcmp.gt.f32.partialorder %v464, 0.0
    %vm469 = vcmp.gt.f32.partialorder %v465, 0.0
    %vm470 = vcmp.gt.f32.partialorder %v466, 0.0
    %vm471 = vcmp.gt.f32.partialorder %v467, 0.0
    %v472 = vmul.f32 %v464, 0.01
    %v473 = vmul.f32 %v465, 0.01
    %v474 = vmul.f32 %v466, 0.01
    %v475 = vmul.f32 %v467, 0.01
    %v476 = vsel %vm468, %v464, %v472
    %v477 = vsel %vm469, %v465, %v473
    %v478 = vsel %vm470, %v466, %v474
    %v479 = vsel %vm471, %v467, %v475
    %v484 = vrot.slane %v476, 7
    %v485 = vrot.slane %v477, 7
    %v486 = vsel %vm52, %v484, %v485
    %v487 = vrot.slane %v478, 7
    %v488 = vrot.slane %v479, 7
    %v489 = vsel %vm52, %v487, %v488
    %v496 = vsel %vm52, 0.0, %v484
    %v497 = vsel %vm52, 0.0, %v487
    %v498 = vsel %vm52, %v485, 0.0
    %v499 = vsel %vm52, %v488, 0.0
    %v504 = vrot.slane %v496, 1
    %v505 = vrot.slane %v486, 1
    %v506 = vsel %vm73, %v504, %v505
    %v507 = vrot.slane %v498, 1
    %v508 = vsel %vm73, %v505, %v507
    %v509 = vrot.slane %v497, 1
    %v510 = vrot.slane %v489, 1
    %v511 = vsel %vm73, %v509, %v510
    %v512 = vrot.slane %v499, 1
    %v513 = vsel %vm73, %v510, %v512
    %v518 = vrot.slane %v496, 2
    %v519 = vrot.slane %v486, 2
    %v520 = vsel %vm88, %v518, %v519
    %v521 = vrot.slane %v498, 2
    %v522 = vsel %vm88, %v519, %v521
    %v523 = vrot.slane %v497, 2
    %v524 = vrot.slane %v489, 2
    %v525 = vsel %vm88, %v523, %v524
    %v526 = vrot.slane %v499, 2
    %v527 = vsel %vm88, %v524, %v526
    %v532 = vpack.c.bf16 %v486, %v496
    %v533 = vpack.c.bf16 %v508, %v506
    %v534 = vpack.c.bf16 %v522, %v520
    %v535 = vpack.c.bf16 %v489, %v497
    %v536 = vpack.c.bf16 %v513, %v511
    %v537 = vpack.c.bf16 %v527, %v525
    %s538 = scalar_lea.vmem [#allocation5], 192
    %v539 = vld [vmem:[%s538] sm:$0xf]
    %v540 = vld [vmem:[%s538 + $0x4] sm:$0xf]
    %v541 = vld [vmem:[%s538 + $0x8] sm:$0xf]
    %v542 = vld [vmem:[%s538 + $0xc] sm:$0xf]
    %v543 = vld [vmem:[%s538 + $0x10] sm:$0xf]
    %v544 = vld [vmem:[%s538 + $0x14] sm:$0xf]
    %v545 = vld [vmem:[%s538 + $0x18] sm:$0xf]
    %v546 = vld [vmem:[%s538 + $0x1c] sm:$0xf]
    %v547 = vld [vmem:[%s538 + $0x20] sm:$0xf]
    %v548 = vld [vmem:[%s538 + $0x24] sm:$0xf]
    %v549 = vld [vmem:[%s538 + $0x28] sm:$0xf]
    %v550 = vld [vmem:[%s538 + $0x2c] sm:$0xf]
    %v551 = vld [vmem:[%s538 + $0x30] sm:$0xf]
    %v552 = vld [vmem:[%s538 + $0x34] sm:$0xf]
    %v553 = vld [vmem:[%s538 + $0x38] sm:$0xf]
    %v554 = vld [vmem:[%s538 + $0x3c] sm:$0xf]
    %v555 = vld [vmem:[%s538 + $0x40] sm:$0xf]
    %v556 = vld [vmem:[%s538 + $0x44] sm:$0xf]
    %v557 = vld [vmem:[%s538 + $0x48] sm:$0xf]
    %v558 = vld [vmem:[%s538 + $0x4c] sm:$0xf]
    %v559 = vld [vmem:[%s538 + $0x50] sm:$0xf]
    %v560 = vld [vmem:[%s538 + $0x54] sm:$0xf]
    %v561 = vld [vmem:[%s538 + $0x58] sm:$0xf]
    %v562 = vld [vmem:[%s538 + $0x5c] sm:$0xf]
    %v563 = vld [vmem:[%s538 + $0x60] sm:$0xf]
    %v564 = vld [vmem:[%s538 + $0x64] sm:$0xf]
    %v565 = vld [vmem:[%s538 + $0x68] sm:$0xf]
    %v566 = vld [vmem:[%s538 + $0x6c] sm:$0xf]
    %v567 = vld [vmem:[%s538 + $0x70] sm:$0xf]
    %v568 = vld [vmem:[%s538 + $0x74] sm:$0xf]
    %v569 = vld [vmem:[%s538 + $0x78] sm:$0xf]
    %v570 = vld [vmem:[%s538 + $0x7c] sm:$0xf]
    %v571 = vld [vmem:[%s538 + $0x80] sm:$0xf]
    %v572 = vld [vmem:[%s538 + $0x84] sm:$0xf]
    %v573 = vld [vmem:[%s538 + $0x88] sm:$0xf]
    %v574 = vld [vmem:[%s538 + $0x8c] sm:$0xf]
    %v575 = vld [vmem:[%s538 + $0x90] sm:$0xf]
    %v576 = vld [vmem:[%s538 + $0x94] sm:$0xf]
    %v577 = vld [vmem:[%s538 + $0x98] sm:$0xf]
    %v578 = vld [vmem:[%s538 + $0x9c] sm:$0xf]
    %v579 = vld [vmem:[%s538 + $0xa0] sm:$0xf]
    %v580 = vld [vmem:[%s538 + $0xa4] sm:$0xf]
    %v581 = vld [vmem:[%s538 + $0xa8] sm:$0xf]
    %v582 = vld [vmem:[%s538 + $0xac] sm:$0xf]
    %v583 = vld [vmem:[%s538 + $0xb0] sm:$0xf]
    %v584 = vld [vmem:[%s538 + $0xb4] sm:$0xf]
    %v585 = vld [vmem:[%s538 + $0xb8] sm:$0xf]
    %v586 = vld [vmem:[%s538 + $0xbc] sm:$0xf]
    %v635 = vunpack.c.l.b16 %v539
    %v636 = vunpack.c.l.b16 %v540
    %v637 = vunpack.c.l.b16 %v541
    %v638 = vunpack.c.l.b16 %v542
    %v639 = vunpack.c.l.b16 %v543
    %v640 = vunpack.c.l.b16 %v544
    %v641 = vunpack.c.l.b16 %v545
    %v642 = vunpack.c.l.b16 %v546
    %v643 = vunpack.c.l.b16 %v547
    %v644 = vunpack.c.l.b16 %v548
    %v645 = vunpack.c.l.b16 %v549
    %v646 = vunpack.c.l.b16 %v550
    %v647 = vunpack.c.l.b16 %v551
    %v648 = vunpack.c.l.b16 %v552
    %v649 = vunpack.c.l.b16 %v553
    %v650 = vunpack.c.l.b16 %v554
    %v651 = vunpack.c.l.b16 %v555
    %v652 = vunpack.c.l.b16 %v556
    %v653 = vunpack.c.l.b16 %v557
    %v654 = vunpack.c.l.b16 %v558
    %v655 = vunpack.c.l.b16 %v559
    %v656 = vunpack.c.l.b16 %v560
    %v657 = vunpack.c.l.b16 %v561
    %v658 = vunpack.c.l.b16 %v562
    %v659 = vunpack.c.l.b16 %v563
    %v660 = vunpack.c.l.b16 %v564
    %v661 = vunpack.c.l.b16 %v565
    %v662 = vunpack.c.l.b16 %v566
    %v663 = vunpack.c.l.b16 %v567
    %v664 = vunpack.c.l.b16 %v568
    %v665 = vunpack.c.l.b16 %v569
    %v666 = vunpack.c.l.b16 %v570
    %v667 = vunpack.c.l.b16 %v571
    %v668 = vunpack.c.l.b16 %v572
    %v669 = vunpack.c.l.b16 %v573
    %v670 = vunpack.c.l.b16 %v574
    %v671 = vunpack.c.l.b16 %v575
    %v672 = vunpack.c.l.b16 %v576
    %v673 = vunpack.c.l.b16 %v577
    %v674 = vunpack.c.l.b16 %v578
    %v675 = vunpack.c.l.b16 %v579
    %v676 = vunpack.c.l.b16 %v580
    %v677 = vunpack.c.l.b16 %v581
    %v678 = vunpack.c.l.b16 %v582
    %v679 = vunpack.c.l.b16 %v583
    %v680 = vunpack.c.l.b16 %v584
    %v681 = vunpack.c.l.b16 %v585
    %v682 = vunpack.c.l.b16 %v586
    %v683 = vpack.c.b16 %v636, %v635
    %v684 = vpack.c.b16 %v638, %v637
    %v685 = vpack.c.b16 %v640, %v639
    %v686 = vpack.c.b16 %v642, %v641
    %v687 = vpack.c.b16 %v644, %v643
    %v688 = vpack.c.b16 %v646, %v645
    %v689 = vpack.c.b16 %v648, %v647
    %v690 = vpack.c.b16 %v650, %v649
    %v691 = vpack.c.b16 %v652, %v651
    %v692 = vpack.c.b16 %v654, %v653
    %v693 = vpack.c.b16 %v656, %v655
    %v694 = vpack.c.b16 %v658, %v657
    %v695 = vpack.c.b16 %v660, %v659
    %v696 = vpack.c.b16 %v662, %v661
    %v697 = vpack.c.b16 %v664, %v663
    %v698 = vpack.c.b16 %v666, %v665
    %v699 = vpack.c.b16 %v668, %v667
    %v700 = vpack.c.b16 %v670, %v669
    %v701 = vpack.c.b16 %v672, %v671
    %v702 = vpack.c.b16 %v674, %v673
    %v703 = vpack.c.b16 %v676, %v675
    %v704 = vpack.c.b16 %v678, %v677
    %v705 = vpack.c.b16 %v680, %v679
    %v706 = vpack.c.b16 %v682, %v681
    %731 = vmatprep.subr.bf16.mxu0 0
    %732 = vmatpush1.bf16.msra.mxu0 %v683
    %733 = vmatprep.subr.bf16.mxu0 0
    %734 = vmatpush1.bf16.msra.mxu0 %v684
    %735 = vmatprep.subr.bf16.mxu0 0
    %736 = vmatpush1.bf16.msra.mxu0 %v685
    %737 = vmatprep.subr.bf16.mxu0 0
    %738 = vmatpush1.bf16.msra.mxu0 %v686
    %739 = vmatprep.subr.bf16.mxu0 0
    %740 = vmatpush1.bf16.msra.mxu0 %v687
    %741 = vmatprep.subr.bf16.mxu0 0
    %742 = vmatpush1.bf16.msra.mxu0 %v688
    %743 = vmatprep.subr.bf16.mxu0 0
    %744 = vmatpush1.bf16.msra.mxu0 %v689
    %745 = vmatprep.subr.bf16.mxu0 0
    %746 = vmatpush1.bf16.msra.mxu0 %v690
    %747 = vmatprep.subr.bf16.mxu0 0
    %748 = vmatpush1.bf16.msra.mxu0 %v691
    %749 = vmatprep.subr.bf16.mxu0 0
    %750 = vmatpush1.bf16.msra.mxu0 %v692
    %751 = vmatprep.subr.bf16.mxu0 0
    %752 = vmatpush1.bf16.msra.mxu0 %v693
    %753 = vmatprep.subr.bf16.mxu0 0
    %754 = vmatpush1.bf16.msra.mxu0 %v694
    %755 = vmatprep.subr.bf16.mxu0 0
    %756 = vmatpush1.bf16.msra.mxu0 %v695
    %757 = vmatprep.subr.bf16.mxu0 0
    %758 = vmatpush1.bf16.msra.mxu0 %v696
    %759 = vmatprep.subr.bf16.mxu0 0
    %760 = vmatpush1.bf16.msra.mxu0 %v697
    %761 = vmatprep.subr.bf16.mxu0 0
    %762 = vmatpush1.bf16.msra.mxu0 %v698
    %763 = vmatprep.mubr.bf16.mxu0 %v533
    %764 = vmatmul.mubr.bf16.gmra.mrb[0].mxu0 %v532
    %v765 = vpop.f32.mrb[0].mxu0
    %v766 = vadd.f32 0.0, %v765
    %v767 = vpop.f32.mrb[0].mxu0
    %v768 = vpop.f32.mrb[0].mxu0
    %v769 = vadd.f32 0.0, %v768
    %v770 = vpop.f32.mrb[0].mxu0
    %771 = vmatprep.mubr.bf16.mxu0 %v536
    %772 = vmatmul.mubr.bf16.gmra.mrb[0].mxu0 %v535
    %v773 = vpop.f32.mrb[0].mxu0
    %v774 = vadd.f32 0.0, %v773
    %v775 = vpop.f32.mrb[0].mxu0
    %v776 = vpop.f32.mrb[0].mxu0
    %v777 = vadd.f32 0.0, %v776
    %v778 = vpop.f32.mrb[0].mxu0
    %779 = vdwg.mxu0
    %780 = vmatprep.subr.bf16.mxu0 0
    %781 = vmatpush1.bf16.msra.mxu0 %v699
    %782 = vmatprep.subr.bf16.mxu0 0
    %783 = vmatpush1.bf16.msra.mxu0 %v700
    %784 = vmatprep.subr.bf16.mxu0 0
    %785 = vmatpush1.bf16.msra.mxu0 %v701
    %786 = vmatprep.subr.bf16.mxu0 0
    %787 = vmatpush1.bf16.msra.mxu0 %v702
    %788 = vmatprep.subr.bf16.mxu0 0
    %789 = vmatpush1.bf16.msra.mxu0 %v703
    %790 = vmatprep.subr.bf16.mxu0 0
    %791 = vmatpush1.bf16.msra.mxu0 %v704
    %792 = vmatprep.subr.bf16.mxu0 0
    %793 = vmatpush1.bf16.msra.mxu0 %v705
    %794 = vmatprep.subr.bf16.mxu0 0
    %795 = vmatpush1.bf16.msra.mxu0 %v706
    %796 = vmatprep.subr.bf16.mxu0 0
    %797 = vmatpush1.bf16.msra.mxu0 0
    %798 = vmatprep.subr.bf16.mxu0 0
    %799 = vmatpush1.bf16.msra.mxu0 0
    %800 = vmatprep.subr.bf16.mxu0 0
    %801 = vmatpush1.bf16.msra.mxu0 0
    %802 = vmatprep.subr.bf16.mxu0 0
    %803 = vmatpush1.bf16.msra.mxu0 0
    %804 = vmatprep.subr.bf16.mxu0 0
    %805 = vmatpush1.bf16.msra.mxu0 0
    %806 = vmatprep.subr.bf16.mxu0 0
    %807 = vmatpush1.bf16.msra.mxu0 0
    %808 = vmatprep.subr.bf16.mxu0 0
    %809 = vmatpush1.bf16.msra.mxu0 0
    %810 = vmatprep.subr.bf16.mxu0 0
    %811 = vmatpush1.bf16.msra.mxu0 0
    %812 = vmatprep.mubr.bf16.mxu0 0
    %813 = vmatmul.mubr.bf16.gmra.mrb[0].mxu0 %v534
    %v814 = vpop.f32.mrb[0].mxu0
    %v815 = vadd.f32 %v766, %v814
    %v816 = vpop.f32.mrb[0].mxu0
    %v817 = vpop.f32.mrb[0].mxu0
    %v818 = vadd.f32 %v769, %v817
    %v819 = vpop.f32.mrb[0].mxu0
    %820 = vmatprep.mubr.bf16.mxu0 0
    %821 = vmatmul.mubr.bf16.gmra.mrb[0].mxu0 %v537
    %v822 = vpop.f32.mrb[0].mxu0
    %v823 = vadd.f32 %v774, %v822
    %v824 = vpop.f32.mrb[0].mxu0
    %v825 = vpop.f32.mrb[0].mxu0
    %v826 = vadd.f32 %v777, %v825
    %v827 = vpop.f32.mrb[0].mxu0
    %828 = vdwg.mxu0
    %v829 = vadd.f32 %v815, %v818
    %v830 = vadd.f32 %v829, %v823
    %v831 = vadd.f32 %v830, %v826
    %v832 = vrot.slane %v831, 4
    %v833 = vadd.f32 %v831, %v832
    %v834 = vrot.slane %v833, 2
    %v835 = vadd.f32 %v833, %v834
    %v836 = vrot.slane %v835, 1
    %v837 = vadd.f32 %v835, %v836
    %v838 = vmul.f32 %v815, %v815
    %v839 = vmul.f32 %v818, %v818
    %v840 = vmul.f32 %v823, %v823
    %v841 = vmul.f32 %v826, %v826
    %v842 = vadd.f32 %v838, %v839
    %v843 = vadd.f32 %v842, %v840
    %v844 = vadd.f32 %v843, %v841
    %v845 = vrot.slane %v844, 4
    %v846 = vadd.f32 %v844, %v845
    %v847 = vrot.slane %v846, 2
    %v848 = vadd.f32 %v846, %v847
    %v849 = vrot.slane %v848, 1
    %v850 = vadd.f32 %v848, %v849
    %v851 = vsel %vm52, %v837, %v850
    %852 = vrot.lane.b32.xlu0 %v851, 8
    %v853 = vpop.permute.xlu0 %852
    %v854 = vadd.f32 %v851, %v853
    %855 = vrot.lane.b32.xlu0 %v854, 16
    %v856 = vpop.permute.xlu0 %855
    %v857 = vadd.f32 %v854, %v856
    %858 = vrot.lane.b32.xlu0 %v857, 32
    %v859 = vpop.permute.xlu0 %858
    %v860 = vadd.f32 %v857, %v859
    %861 = vrot.lane.b32.xlu0 %v860, 64
    %v862 = vpop.permute.xlu0 %861
    %v863 = vadd.f32 %v860, %v862
    %v864 = vmul.f32 %v863, 0.001953125
    %v865 = vmul.f32 %v864, %v864
    %v867 = vrot.slane %v865, 7
    %v869 = vsub.f32 %v864, %v867
    %s870 = scalar_lea.vmem %s2, 2
    %v871 = vld [vmem:[%s870] sm:$0x3]
    %v872 = vadd.f32 %v869, 1e-05
    %v873 = vrsqrt.pop %v872
    %v875 = vrot.slane %v873, 1
    %v877 = vmul.f32 %v871, %v875
    %v878 = vmul.f32 %v864, %v877
    %v880 = vrot.slane %v878, 7
    %v882 = vsub.f32 %v871, %v880
    %v883 = vlaneseq
    %v884 = vshrl.u32 %v883, 7
    %v885 = vsub.s32 0, %v884
    %v886 = vrot.slane %v877, %v885
    %v887 = vmul.f32 %v815, %v886
    %v888 = vmul.f32 %v818, %v886
    %v889 = vmul.f32 %v823, %v886
    %v890 = vmul.f32 %v826, %v886
    %v891 = vlaneseq
    %v892 = vshrl.u32 %v891, 7
    %v893 = vsub.s32 1, %v892
    %v894 = vrot.slane %v882, %v893
    %v895 = vadd.f32 %v887, %v894
    %v896 = vadd.f32 %v888, %v894
    %v897 = vadd.f32 %v889, %v894
    %v898 = vadd.f32 %v890, %v894
    %899 = vst [vmem:[#allocation7] sm:$0xff] %v895
    %900 = vst [vmem:[#allocation7 + $0x8] sm:$0xff] %v896
    %901 = vst [vmem:[#allocation7 + $0x10] sm:$0xff] %v897
    %902 = vst [vmem:[#allocation7 + $0x18] sm:$0xff] %v898
    // Predicated region
    $region22: #{tpu_custom_call.1} parent=1 // pred_check
      _
    $region23: #{tpu_custom_call.1} parent=1 // pred_check_branch
      %904 = sbr.rel (0) target = $region25
    $region24: #{tpu_custom_call.1} parent=1 // pred_region
      %s906 = ssub.s32 512, 512
      %907 = vsyncadd [#allocation4], %s906
      %s908 = sshll.u32 [#allocation7], 4
      %s909 = int_to_ptr.vmem [resolvable:$true] %s908
      %914 = dma.vmem_to_hbm [thread:$0]  %s909, 512, %s3, [#allocation4], 128, 128, 8
    $region25: #{tpu_custom_call.1} parent=1 // pred_fallthru
      _
    // Predicated region
    $region26: #{tpu_custom_call.1} parent=1 // pred_check
      _
    $region27: #{tpu_custom_call.1} parent=1 // pred_check_branch
      %916 = sbr.rel (0) target = $region29
    $region28: #{tpu_custom_call.1} parent=1 // pred_region
      %917 = dma.done [#allocation4], 512
    $region29: #{tpu_custom_call.1} parent=1 // pred_fallthru
      _
    %918 = vsyncpa [#allocation3], 1
    %919 = vsyncpa [#allocation6], 1
    %920 = vsyncpa [#allocation4], 1

</llo_original>
